<compile_context>
chip_gen: v5e
topology: v5e:2x2
jax: 0.10.0
libtpu: 0.0.40
codegen_flags: <defaults>
</compile_context>

<pallas_src>
import jax
import jax.numpy as jnp
from jax.experimental import pallas as pl
from jax.experimental.pallas import tpu as pltpu


def _grad_l1(x, prev_row, col0, row0):
    """TensorGradient(L1=True) of one (C, tile_h, W) image tile.

    col0 / row0 are (tile_h, W) boolean masks marking image column 0 and the
    tile's first row; prev_row is the (C, 1, W) image row directly above the
    tile (zeros for the first tile), so H-tiling reproduces the untiled
    gradient exactly.
    """
    ndim = x.ndim
    # left[..., j] = x[..., j-1]   (0 at j == 0)
    left = jnp.where(col0, 0.0, pltpu.roll(x, 1, ndim - 1))
    # up[..., i, :] = x[..., i-1, :]   (prev_row at i == 0)
    up = jnp.where(row0, prev_row, pltpu.roll(x, 1, ndim - 2))
    return jnp.abs(left - x) + jnp.abs(up - x)


def _vmem_capacity_bytes():
    try:
        cap = int(pltpu.get_tpu_info().vmem_capacity_bytes)
        if cap > 0:
            return cap
    except Exception:
        pass
    return 64 << 20   # conservative default (v7x per-TensorCore VMEM)


def _vmem_bytes(tile_h, C, W, n_preds, in_itemsize, c_itemsize):
    lanes = pl.cdiv(W, 128) * 128
    sub = pl.cdiv(tile_h, 8) * 8
    blk_in = C * sub * lanes * in_itemsize
    return (2 * blk_in                                    # pred (double-buffered)
            + 2 * blk_in                                  # gt (double-buffered)
            + C * sub * lanes * c_itemsize                # grad(gt) cache
            + 2 * sub * lanes * 4                         # partial-sum out block
            + (n_preds + 1) * C * 8 * lanes * c_itemsize) # halo-row carries


def _pick_tile_h(H, C, W, n_preds, in_itemsize, c_itemsize, budget_bytes):
    """Largest legal H tile within the VMEM budget (no divisibility required)."""
    if H <= 8 or _vmem_bytes(H, C, W, n_preds, in_itemsize, c_itemsize) <= budget_bytes:
        return H
    for th in range((H // 8) * 8, 0, -8):
        if _vmem_bytes(th, C, W, n_preds, in_itemsize, c_itemsize) <= budget_bytes:
            return th
    return 8   # smallest pipelinable tile; may exceed budget but stays correct


def loss_anneal(global_step, pred_i, ground_truth, alpha=0.9998, beta=100.0,
                tile_h=None, compute_dtype=None):
    """pred_i: [B, N, C, H, W], ground_truth: [B, C, H, W] -> scalar f32 loss."""
    B, N, C, H, W = pred_i.shape
    assert ground_truth.shape == (B, C, H, W)

    in_dtype = jnp.dtype(pred_i.dtype)
    if compute_dtype is None:
        # Gradient math runs in the input dtype (bf16 inputs -> bf16 VPU path on
        # v6e/v7x); accumulation stays f32. Pass jnp.float32 explicitly on v5e.
        compute_dtype = in_dtype if in_dtype in (jnp.dtype(jnp.bfloat16),
                                                 jnp.dtype(jnp.float32)) else jnp.float32
    cdtype = jnp.dtype(compute_dtype)

    vmem_cap = _vmem_capacity_bytes()
    # Generation-aware tile budget: ~56 MiB on 128 MiB parts (v5e/v6e),
    # ~24 MiB on 64 MiB-per-TC parts (v7x).
    budget = max(16 << 20, vmem_cap // 2 - (8 << 20))

    if tile_h is None:
        tile_h = _pick_tile_h(H, C, W, N, in_dtype.itemsize, cdtype.itemsize, budget)
    assert tile_h == H or tile_h % 8 == 0
    n_tiles = pl.cdiv(H, tile_h)
    needs_tail_mask = (H % tile_h) != 0

    # Scoped-VMEM limit: never below the estimate, capped near physical VMEM
    # (~96 MiB on 128 MiB parts, ~48 MiB on v7x).
    vmem_est = _vmem_bytes(tile_h, C, W, N, in_dtype.itemsize, cdtype.itemsize) + (2 << 20)
    vmem_cap_limit = max(48 << 20, vmem_cap - (32 << 20))
    vmem_limit = int(max(min(max(vmem_est, 32 << 20), vmem_cap_limit), vmem_est))

    def kernel(pred_ref, gt_ref, out_ref, gg_ref, prow_ref, grow_ref):
        # grid = (B, n_tiles, N); B parallel, (H-tile, prediction) sequential.
        t = pl.program_id(1)
        n = pl.program_id(2)

        # First iteration for this batch element: clear accumulator + halos.
        @pl.when((t == 0) & (n == 0))
        def _init():
            out_ref[...] = jnp.zeros_like(out_ref)
            prow_ref[...] = jnp.zeros_like(prow_ref)
            grow_ref[...] = jnp.zeros_like(grow_ref)

        p_in = pred_ref[...]                 # (C, tile_h, W)
        g_in = gt_ref[...]
        p = p_in.astype(cdtype)              # gradient-math dtype
        g = g_in.astype(cdtype)

        # Boundary masks at (tile_h, W): generated once per grid step (~1/C of
        # the element count) and shared by both gradient calls.
        col0 = jax.lax.broadcasted_iota(jnp.int32, (tile_h, W), 1) == 0
        row0 = jax.lax.broadcasted_iota(jnp.int32, (tile_h, W), 0) == 0

        # grad(ground truth): compute once per H-tile, reuse for all N preds.
        @pl.when(n == 0)
        def _cache_gt_grad():
            gg_ref[...] = _grad_l1(g, grow_ref[...], col0, row0)
            grow_ref[...] = g[:, -1:, :]     # halo row for the next H-tile

        gp = _grad_l1(p, prow_ref[n], col0, row0)
        prow_ref[n] = p[:, -1:, :]           # halo row for this prediction

        # Fused per-element loss: (pred - gt)^2 + |grad(pred) - grad(gt)|,
        # combined and accumulated in f32 regardless of the gradient dtype.
        diff = p_in.astype(jnp.float32) - g_in.astype(jnp.float32)
        combined = diff * diff + jnp.abs(gp - gg_ref[...]).astype(jnp.float32)

        if needs_tail_mask:
            # Last H-tile sticks out past H: zero the padded rows' contribution
            # (single select; padded-row garbage never reaches valid rows).
            row_idx = jax.lax.broadcasted_iota(jnp.int32, (tile_h, W), 0)
            combined = jnp.where(row_idx < (H - t * tile_h), combined, 0.0)

        # Channel-axis reduction only (VPU adds into the resident accumulator);
        # the cross-lane/sublane sum + normalisation happen in the wrapper.
        out_ref[...] += jnp.sum(combined, axis=0)

    partial = pl.pallas_call(
        kernel,
        out_shape=jax.ShapeDtypeStruct((B, tile_h, W), jnp.float32),
        grid=(B, n_tiles, N),
        in_specs=[
            # pred_i: one (C, tile_h, W) slab of prediction n, H-tile t, batch b.
            pl.BlockSpec((None, None, C, tile_h, W),
                         lambda b, t, n: (b, n, 0, t, 0)),
            # ground truth: block index constant across n -> fetched once per
            # (b, t) and resident across the inner N loop.
            pl.BlockSpec((None, C, tile_h, W),
                         lambda b, t, n: (b, 0, t, 0)),
        ],
        # Per-batch partial-sum slab, resident across the (tile, N) reduction.
        out_specs=pl.BlockSpec((None, tile_h, W), lambda b, t, n: (b, 0, 0)),
        scratch_shapes=[
            pltpu.VMEM((C, tile_h, W), cdtype),   # grad(gt) cache
            pltpu.VMEM((N, C, 1, W), cdtype),     # halo row per prediction
            pltpu.VMEM((C, 1, W), cdtype),        # halo row for gt
        ],
        compiler_params=pltpu.CompilerParams(
            dimension_semantics=("parallel", "arbitrary", "arbitrary"),
            vmem_limit_bytes=vmem_limit),
    )(pred_i, ground_truth)

    # Finalize outside the kernel: single small reduction + anneal scale.
    n_elem = B * C * H * W
    scale = jnp.float32(beta) * jnp.float32(alpha) ** jnp.asarray(global_step)
    return (scale * jnp.sum(partial) / jnp.float32(N * n_elem)).astype(jnp.float32)


# ----------------------------- pure-JAX reference ---------------------------

def _tensor_gradient_l1_ref(x):
    x_prev_w = jnp.concatenate([jnp.zeros_like(x[..., :1]), x[..., :-1]], axis=-1)
    x_prev_h = jnp.concatenate(
        [jnp.zeros_like(x[..., :1, :]), x[..., :-1, :]], axis=-2)
    return jnp.abs(x_prev_w - x) + jnp.abs(x_prev_h - x)


def _reference_loss(global_step, pred_i, ground_truth, alpha=0.9998, beta=100.0):
    N = pred_i.shape[1]
    g = ground_truth.astype(jnp.float32)
    gg = _tensor_gradient_l1_ref(g)
    total = jnp.float32(0.0)
    for i in range(N):
        p = pred_i[:, i].astype(jnp.float32)
        mse = jnp.mean((p - g) ** 2)
        l1 = jnp.mean(jnp.abs(_tensor_gradient_l1_ref(p) - gg))
        total = total + mse + l1
    return jnp.float32(beta * alpha ** global_step) * total / N


if __name__ == "__main__":
    key = jax.random.PRNGKey(0)
    k1, k2, k3, k4, k5, k6 = jax.random.split(key, 6)

    # Config 1: B=2, N=4, C=3, 16x16 — tiled (2 x 8 rows) and untiled H.
    B, N, C, H, W = 2, 4, 3, 16, 16
    pred_i = jax.random.normal(k1, (B, N, C, H, W), dtype=jnp.float32)
    ground_truth = jax.random.normal(k2, (B, C, H, W), dtype=jnp.float32)
    global_step = 100

    ref = jax.block_until_ready(_reference_loss(global_step, pred_i, ground_truth))
    for th in (8, 16, None):
        loss = jax.block_until_ready(
            loss_anneal(global_step, pred_i, ground_truth, tile_h=th))
        assert jnp.allclose(loss, ref, rtol=1e-4, atol=1e-5), (th, loss, ref)

    # Config 2: H=20 is not a multiple of the tile — exercises the padded-tail
    # masking, carried halos over 2-3 tiles, and the auto-picked untiled path.
    B2, N2, C2, H2, W2 = 1, 2, 3, 20, 24
    pred2 = jax.random.normal(k3, (B2, N2, C2, H2, W2), dtype=jnp.float32)
    gt2 = jax.random.normal(k4, (B2, C2, H2, W2), dtype=jnp.float32)
    ref2 = jax.block_until_ready(_reference_loss(7, pred2, gt2))
    for th in (8, 16, None):
        out2 = jax.block_until_ready(loss_anneal(7, pred2, gt2, tile_h=th))
        assert jnp.allclose(out2, ref2, rtol=1e-4, atol=1e-5), (th, out2, ref2)

    # Config 3: bf16 inputs -> bf16 gradient-math path (f32 accumulation).
    pred3 = jax.random.normal(k5, (B, N, C, H, W), dtype=jnp.float32).astype(jnp.bfloat16)
    gt3 = jax.random.normal(k6, (B, C, H, W), dtype=jnp.float32).astype(jnp.bfloat16)
    ref3 = jax.block_until_ready(_reference_loss(50, pred3, gt3))
    out3 = jax.block_until_ready(loss_anneal(50, pred3, gt3, tile_h=8))
    assert jnp.allclose(out3, ref3, rtol=5e-2, atol=1e-2), (out3, ref3)

    print("KERNEL_OK")
</pallas_src>

<mosaic_0001>
module attributes {stable_mosaic.version = 11 : i64} {
  func.func @kernel(%arg0: i32, %arg1: i32, %arg2: i32, %arg3: memref<1x1x3x8x16xf32, #tpu.memory_space<vmem>>, %arg4: memref<1x3x8x16xf32, #tpu.memory_space<vmem>>, %arg5: memref<1x8x16xf32, #tpu.memory_space<vmem>>, %arg6: memref<3x8x16xf32, #tpu.memory_space<vmem>>, %arg7: memref<4x3x1x16xf32, #tpu.memory_space<vmem>>, %arg8: memref<3x1x16xf32, #tpu.memory_space<vmem>>) attributes {dimension_semantics = [#tpu.dimension_semantics<parallel>, #tpu.dimension_semantics<arbitrary>, #tpu.dimension_semantics<arbitrary>], iteration_bounds = array<i64: 2, 2, 4>, scalar_prefetch = 0 : i64, scratch_operands = 3 : i64, tpu.core_type = #tpu.core_type<tc>, window_params = [{transform_indices = @transform_0, window_bounds = array<i64: 1, 1, 3, 8, 16>}, {transform_indices = @transform_1, window_bounds = array<i64: 1, 3, 8, 16>}, {transform_indices = @transform_2, window_bounds = array<i64: 1, 8, 16>}]} {
    %c0_i32 = arith.constant 0 : i32
    %0 = arith.cmpi eq, %arg1, %c0_i32 : i32
    %c0_i32_0 = arith.constant 0 : i32
    %1 = arith.cmpi eq, %arg2, %c0_i32_0 : i32
    %2 = arith.andi %0, %1 : i1
    %3 = arith.extui %2 : i1 to i32
    %c0_i32_1 = arith.constant 0 : i32
    %4 = arith.cmpi ne, %3, %c0_i32_1 : i32
    scf.if %4 {
      %cst_31 = arith.constant 0.000000e+00 : f32
      %55 = vector.broadcast %cst_31 : f32 to vector<8x16xf32>
      %c0_32 = arith.constant 0 : index
      %c0_33 = arith.constant 0 : index
      %c0_34 = arith.constant 0 : index
      %56 = vector.load %arg5[%c0_32, %c0_33, %c0_34] : memref<1x8x16xf32, #tpu.memory_space<vmem>>, vector<1x8x16xf32>
      %57 = vector.shape_cast %56 : vector<1x8x16xf32> to vector<8x16xf32>
      %58 = vector.shape_cast %55 : vector<8x16xf32> to vector<1x8x16xf32>
      tpu.vector_store %arg5[%c0_32, %c0_33, %c0_34], %58 {strides = array<i32>} : memref<1x8x16xf32, #tpu.memory_space<vmem>>, vector<1x8x16xf32>,
      %cst_35 = arith.constant 0.000000e+00 : f32
      %59 = vector.broadcast %cst_35 : f32 to vector<4x3x1x16xf32>
      %c0_36 = arith.constant 0 : index
      %c0_37 = arith.constant 0 : index
      %c0_38 = arith.constant 0 : index
      %c0_39 = arith.constant 0 : index
      %60 = vector.load %arg7[%c0_36, %c0_37, %c0_38, %c0_39] : memref<4x3x1x16xf32, #tpu.memory_space<vmem>>, vector<4x3x1x16xf32>
      tpu.vector_store %arg7[%c0_36, %c0_37, %c0_38, %c0_39], %59 {strides = array<i32>} : memref<4x3x1x16xf32, #tpu.memory_space<vmem>>, vector<4x3x1x16xf32>,
      %cst_40 = arith.constant 0.000000e+00 : f32
      %61 = vector.broadcast %cst_40 : f32 to vector<3x1x16xf32>
      %c0_41 = arith.constant 0 : index
      %c0_42 = arith.constant 0 : index
      %c0_43 = arith.constant 0 : index
      %62 = vector.load %arg8[%c0_41, %c0_42, %c0_43] : memref<3x1x16xf32, #tpu.memory_space<vmem>>, vector<3x1x16xf32>
      tpu.vector_store %arg8[%c0_41, %c0_42, %c0_43], %61 {strides = array<i32>} : memref<3x1x16xf32, #tpu.memory_space<vmem>>, vector<3x1x16xf32>,
    } else {
    }
    %c0 = arith.constant 0 : index
    %c0_2 = arith.constant 0 : index
    %c0_3 = arith.constant 0 : index
    %c0_4 = arith.constant 0 : index
    %c0_5 = arith.constant 0 : index
    %5 = vector.load %arg3[%c0, %c0_2, %c0_3, %c0_4, %c0_5] : memref<1x1x3x8x16xf32, #tpu.memory_space<vmem>>, vector<1x1x3x8x16xf32>
    %6 = vector.shape_cast %5 : vector<1x1x3x8x16xf32> to vector<3x8x16xf32>
    %c0_6 = arith.constant 0 : index
    %c0_7 = arith.constant 0 : index
    %c0_8 = arith.constant 0 : index
    %c0_9 = arith.constant 0 : index
    %7 = vector.load %arg4[%c0_6, %c0_7, %c0_8, %c0_9] : memref<1x3x8x16xf32, #tpu.memory_space<vmem>>, vector<1x3x8x16xf32>
    %8 = vector.shape_cast %7 : vector<1x3x8x16xf32> to vector<3x8x16xf32>
    %9 = tpu.iota {dimensions = array<i32: 1>} : vector<8x16xi32>
    %c0_i32_10 = arith.constant 0 : i32
    %10 = vector.broadcast %c0_i32_10 : i32 to vector<8x16xi32>
    %11 = arith.cmpi eq, %9, %10 : vector<8x16xi32>
    %12 = tpu.iota {dimensions = array<i32: 0>} : vector<8x16xi32>
    %c0_i32_11 = arith.constant 0 : i32
    %13 = vector.broadcast %c0_i32_11 : i32 to vector<8x16xi32>
    %14 = arith.cmpi eq, %12, %13 : vector<8x16xi32>
    %c0_i32_12 = arith.constant 0 : i32
    %15 = arith.cmpi eq, %arg2, %c0_i32_12 : i32
    %16 = arith.extui %15 : i1 to i32
    %c0_i32_13 = arith.constant 0 : i32
    %17 = arith.cmpi ne, %16, %c0_i32_13 : i32
    scf.if %17 {
      %c0_31 = arith.constant 0 : index
      %c0_32 = arith.constant 0 : index
      %c0_33 = arith.constant 0 : index
      %55 = vector.load %arg8[%c0_31, %c0_32, %c0_33] : memref<3x1x16xf32, #tpu.memory_space<vmem>>, vector<3x1x16xf32>
      %c1_i32_34 = arith.constant 1 : i32
      %56 = tpu.dynamic_rotate %8 by %c1_i32_34 dim 2 : vector<3x8x16xf32>, i32 -> vector<3x8x16xf32>
      %cst_35 = arith.constant 0.000000e+00 : f32
      %57 = vector.shape_cast %11 : vector<8x16xi1> to vector<1x8x16xi1>
      %58 = vector.broadcast %57 : vector<1x8x16xi1> to vector<3x8x16xi1>
      %59 = vector.broadcast %cst_35 : f32 to vector<3x8x16xf32>
      %60 = arith.select %58, %59, %56 : vector<3x8x16xi1>, vector<3x8x16xf32>
      %c1_i32_36 = arith.constant 1 : i32
      %61 = tpu.dynamic_rotate %8 by %c1_i32_36 dim 1 : vector<3x8x16xf32>, i32 -> vector<3x8x16xf32>
      %62 = vector.shape_cast %14 : vector<8x16xi1> to vector<1x8x16xi1>
      %63 = vector.broadcast %62 : vector<1x8x16xi1> to vector<3x8x16xi1>
      %64 = vector.shape_cast %55 : vector<3x1x16xf32> to vector<3x1x16xf32>
      %65 = vector.broadcast %64 : vector<3x1x16xf32> to vector<3x8x16xf32>
      %66 = arith.select %63, %65, %61 : vector<3x8x16xi1>, vector<3x8x16xf32>
      %67 = arith.subf %60, %8 : vector<3x8x16xf32>
      %68 = math.absf %67 : vector<3x8x16xf32>
      %69 = arith.subf %66, %8 : vector<3x8x16xf32>
      %70 = math.absf %69 : vector<3x8x16xf32>
      %71 = arith.addf %68, %70 : vector<3x8x16xf32>
      %c0_37 = arith.constant 0 : index
      %c0_38 = arith.constant 0 : index
      %c0_39 = arith.constant 0 : index
      %72 = vector.load %arg6[%c0_37, %c0_38, %c0_39] : memref<3x8x16xf32, #tpu.memory_space<vmem>>, vector<3x8x16xf32>
      tpu.vector_store %arg6[%c0_37, %c0_38, %c0_39], %71 {strides = array<i32>} : memref<3x8x16xf32, #tpu.memory_space<vmem>>, vector<3x8x16xf32>,
      %73 = vector.extract_strided_slice %8 {offsets = [0, 7, 0], sizes = [3, 1, 16], strides = [1, 1, 1]} : vector<3x8x16xf32> to vector<3x1x16xf32>
      %c0_40 = arith.constant 0 : index
      %c0_41 = arith.constant 0 : index
      %c0_42 = arith.constant 0 : index
      %74 = vector.load %arg8[%c0_40, %c0_41, %c0_42] : memref<3x1x16xf32, #tpu.memory_space<vmem>>, vector<3x1x16xf32>
      tpu.vector_store %arg8[%c0_40, %c0_41, %c0_42], %73 {strides = array<i32>} : memref<3x1x16xf32, #tpu.memory_space<vmem>>, vector<3x1x16xf32>,
    } else {
    }
    %18 = arith.index_cast %arg2 : i32 to index
    %c0_14 = arith.constant 0 : index
    %c0_15 = arith.constant 0 : index
    %c0_16 = arith.constant 0 : index
    %19 = vector.load %arg7[%18, %c0_14, %c0_15, %c0_16] : memref<4x3x1x16xf32, #tpu.memory_space<vmem>>, vector<1x3x1x16xf32>
    %20 = vector.shape_cast %19 : vector<1x3x1x16xf32> to vector<3x1x16xf32>
    %c1_i32 = arith.constant 1 : i32
    %21 = tpu.dynamic_rotate %6 by %c1_i32 dim 2 : vector<3x8x16xf32>, i32 -> vector<3x8x16xf32>
    %cst = arith.constant 0.000000e+00 : f32
    %22 = vector.shape_cast %11 : vector<8x16xi1> to vector<1x8x16xi1>
    %23 = vector.broadcast %22 : vector<1x8x16xi1> to vector<3x8x16xi1>
    %24 = vector.broadcast %cst : f32 to vector<3x8x16xf32>
    %25 = arith.select %23, %24, %21 : vector<3x8x16xi1>, vector<3x8x16xf32>
    %c1_i32_17 = arith.constant 1 : i32
    %26 = tpu.dynamic_rotate %6 by %c1_i32_17 dim 1 : vector<3x8x16xf32>, i32 -> vector<3x8x16xf32>
    %27 = vector.shape_cast %14 : vector<8x16xi1> to vector<1x8x16xi1>
    %28 = vector.broadcast %27 : vector<1x8x16xi1> to vector<3x8x16xi1>
    %29 = vector.shape_cast %20 : vector<3x1x16xf32> to vector<3x1x16xf32>
    %30 = vector.broadcast %29 : vector<3x1x16xf32> to vector<3x8x16xf32>
    %31 = arith.select %28, %30, %26 : vector<3x8x16xi1>, vector<3x8x16xf32>
    %32 = arith.subf %25, %6 : vector<3x8x16xf32>
    %33 = math.absf %32 : vector<3x8x16xf32>
    %34 = arith.subf %31, %6 : vector<3x8x16xf32>
    %35 = math.absf %34 : vector<3x8x16xf32>
    %36 = arith.addf %33, %35 : vector<3x8x16xf32>
    %37 = vector.extract_strided_slice %6 {offsets = [0, 7, 0], sizes = [3, 1, 16], strides = [1, 1, 1]} : vector<3x8x16xf32> to vector<3x1x16xf32>
    %38 = arith.index_cast %arg2 : i32 to index
    %c0_18 = arith.constant 0 : index
    %c0_19 = arith.constant 0 : index
    %c0_20 = arith.constant 0 : index
    %39 = vector.load %arg7[%38, %c0_18, %c0_19, %c0_20] : memref<4x3x1x16xf32, #tpu.memory_space<vmem>>, vector<1x3x1x16xf32>
    %40 = vector.shape_cast %39 : vector<1x3x1x16xf32> to vector<3x1x16xf32>
    %41 = vector.shape_cast %37 : vector<3x1x16xf32> to vector<1x3x1x16xf32>
    tpu.vector_store %arg7[%38, %c0_18, %c0_19, %c0_20], %41 {strides = array<i32>} : memref<4x3x1x16xf32, #tpu.memory_space<vmem>>, vector<1x3x1x16xf32>,
    %42 = arith.subf %6, %8 : vector<3x8x16xf32>
    %43 = arith.mulf %42, %42 : vector<3x8x16xf32>
    %c0_21 = arith.constant 0 : index
    %c0_22 = arith.constant 0 : index
    %c0_23 = arith.constant 0 : index
    %44 = vector.load %arg6[%c0_21, %c0_22, %c0_23] : memref<3x8x16xf32, #tpu.memory_space<vmem>>, vector<3x8x16xf32>
    %45 = arith.subf %36, %44 : vector<3x8x16xf32>
    %46 = math.absf %45 : vector<3x8x16xf32>
    %47 = arith.addf %43, %46 : vector<3x8x16xf32>
    %c0_24 = arith.constant 0 : index
    %c0_25 = arith.constant 0 : index
    %c0_26 = arith.constant 0 : index
    %48 = vector.load %arg5[%c0_24, %c0_25, %c0_26] : memref<1x8x16xf32, #tpu.memory_space<vmem>>, vector<1x8x16xf32>
    %49 = vector.shape_cast %48 : vector<1x8x16xf32> to vector<8x16xf32>
    %cst_27 = arith.constant dense<0.000000e+00> : vector<8x16xf32>
    %50 = vector.multi_reduction <add>, %47, %cst_27 [0] : vector<3x8x16xf32> to vector<8x16xf32>
    %51 = arith.addf %49, %50 : vector<8x16xf32>
    %c0_28 = arith.constant 0 : index
    %c0_29 = arith.constant 0 : index
    %c0_30 = arith.constant 0 : index
    %52 = vector.load %arg5[%c0_28, %c0_29, %c0_30] : memref<1x8x16xf32, #tpu.memory_space<vmem>>, vector<1x8x16xf32>
    %53 = vector.shape_cast %52 : vector<1x8x16xf32> to vector<8x16xf32>
    %54 = vector.shape_cast %51 : vector<8x16xf32> to vector<1x8x16xf32>
    tpu.vector_store %arg5[%c0_28, %c0_29, %c0_30], %54 {strides = array<i32>} : memref<1x8x16xf32, #tpu.memory_space<vmem>>, vector<1x8x16xf32>,
    return
  }
  func.func @transform_0(%arg0: i32, %arg1: i32, %arg2: i32) -> (i32, i32, i32, i32, i32) {
    %c0_i32 = arith.constant 0 : i32
    %c0_i32_0 = arith.constant 0 : i32
    %c0_i32_1 = arith.constant 0 : i32
    return %arg0, %arg2, %c0_i32, %arg1, %c0_i32_0 : i32, i32, i32, i32, i32
  }
  func.func @transform_1(%arg0: i32, %arg1: i32, %arg2: i32) -> (i32, i32, i32, i32) {
    %c0_i32 = arith.constant 0 : i32
    %c0_i32_0 = arith.constant 0 : i32
    %c0_i32_1 = arith.constant 0 : i32
    return %arg0, %c0_i32, %arg1, %c0_i32_0 : i32, i32, i32, i32
  }
  func.func @transform_2(%arg0: i32, %arg1: i32, %arg2: i32) -> (i32, i32, i32) {
    %c0_i32 = arith.constant 0 : i32
    %c0_i32_0 = arith.constant 0 : i32
    %c0_i32_1 = arith.constant 0 : i32
    return %arg0, %c0_i32, %c0_i32_0 : i32, i32, i32
  }
}

</mosaic_0001>

<llo_original>
// kernel: tpu_custom_call.1
$region0: #{tpu_custom_call.1}
  #allocation0 [shape = 'u32[]', space=smem, size = 0x4, offset = 0x4, fixed_abs, tag = 'smem constant byte address 0x4 - core index']
  #allocation1 [shape = 'u32[72,128]{1,0:T(1,128)}', space=vmem, size = 0x9000, scoped, tag = 'internal scratch']
  #allocation2 [shape = 'f32[3,8,16]{2,1,0:T(8,128)}', space=vmem, size = 0x3000, scoped, tag = 'scratch operand']
  #allocation3 [shape = 'f32[4,3,1,16]{3,2,1,0:T(1,128)}', space=vmem, size = 0x1800, scoped, tag = 'scratch operand']
  #allocation4 [shape = 'f32[3,1,16]{2,1,0:T(1,128)}', space=vmem, size = 0x600, scoped, tag = 'scratch operand']
  %s0 = inlined_call_operand.hbm [shape: f32[2,4,3,16,16], index: 0, kind: input, shape index: {}]
  %s1 = inlined_call_operand.hbm [shape: f32[2,3,16,16], index: 1, kind: input, shape index: {}]
  %s2 = inlined_call_operand.hbm [shape: f32[2,8,16], index: 2, kind: output, shape index: {}]
  %s3 = sld [smem:[#allocation0]]
  $region57: #{tpu_custom_call.1} parent=0
    _
  %s5 = ssub.s32 1, %s3
  %s6 = scalar_select 0, %s5, %s3
  $region1: #{tpu_custom_call.1} parent=0
    #allocation5 [shape = 'u8[24576]{0}', space=vmem, size = 0x6000, scoped, tag = 'input window, operand 0']
    #allocation6 [shape = 's32[2]{0}', space=sflag, size = 0x8, scoped, tag = 'scoped memory for tpu_custom_call.1']
    #allocation7 [shape = 's32[2]{0}', space=sflag, size = 0x8, scoped, tag = 'scoped memory for tpu_custom_call.1']
    #allocation8 [shape = 'u8[24576]{0}', space=vmem, size = 0x6000, scoped, tag = 'input window, operand 1']
    #allocation9 [shape = 's32[2]{0}', space=sflag, size = 0x8, scoped, tag = 'scoped memory for tpu_custom_call.1']
    #allocation10 [shape = 'u8[8192]{0}', space=vmem, size = 0x2000, scoped, tag = 'output window, operand 0']
    %7 = vsyncpa [#allocation6], 0
    %s8 = scalar_lea.sflag [#allocation6], 1
    %9 = vsyncpa %s8, 0
    %10 = vsyncpa [#allocation9], 0
    %s11 = scalar_lea.sflag [#allocation9], 1
    %12 = vsyncpa %s11, 0
    %13 = vsyncpa [#allocation7], 0
    %s14 = scalar_lea.sflag [#allocation7], 1
    %15 = vsyncpa %s14, 0
    loop: start=0, step=1, limit=18
    $region2: #{tpu_custom_call.1} parent=1 // loop_pre_header
      _
    $region3: #{tpu_custom_call.1} parent=1 // loop_header
      %s17 = sphi 0, %s21
      %p18 = scmp.ge.s32.totalorder %s17, 18
      %s24 = sphi 0, %s43
      %s25 = sphi 0, %s39
      %s26 = sphi 0, %s35
      %s27 = sphi 0, %s24
      %s28 = sphi 0, %s25
      %s29 = sphi 0, %s26
      %s30 = sphi 0, %s27
      %s31 = sphi 0, %s28
      %s32 = sphi 0, %s29
      %s50 = sphi 0, %s52
      %s53 = sphi 0, %s50
      %s54 = sphi 0, %s53
      %s70 = sphi 0, %s54
      %s78 = sphi 0, %s80
      %s81 = sphi 0, %s78
      %s82 = sphi 0, %s81
      %s98 = sphi 0, %s82
      %s104 = sphi 0, %s106
      %s107 = sphi 0, %s104
      %s108 = sphi 0, %s107
      %s124 = sphi 0, %s108
    $region4: #{tpu_custom_call.1} parent=1 // loop_header_branch
      %20 = sbr.rel (%p18) target = $region8
    $region5: #{tpu_custom_call.1} parent=1 // loop_body
      %s22 = ssub.s32 %s17, 1
      %s23 = ssub.s32 %s17, 2
      %s33 = sadd.s32 1, %s26
      %p34 = scmp.ge.s32.totalorder %s33, 4
      %s35 = scalar_select %p34, 0, %s33
      %s36 = sadd.s32 1, %s25
      %s37 = scalar_select %p34, %s36, %s25
      %p38 = scmp.ge.s32.totalorder %s37, 2
      %s39 = scalar_select %p38, 0, %s37
      %s40 = sadd.s32 1, %s24
      %s41 = scalar_select %p38, %s40, %s24
      %p42 = scmp.ge.s32.totalorder %s41, 2
      %s43 = scalar_select %p42, 0, %s41
      %s44 = ssub.s32 %s24, %s43
      %s45 = ssub.s32 %s26, %s35
      %s46 = sor.u32 %s44, %s45
      %s47 = ssub.s32 %s25, %s39
      %s48 = sor.u32 %s46, %s47
      %p49 = scmp.eq.s32.totalorder %s48, 0
      %s51 = sadd.s32 %s50, 1
      %s52 = scalar_select %p49, %s50, %s51
      %p55 = pneg %p49
      %p56 = scmp.eq.s32.totalorder %s17, 15
      %p57 = por %p55, %p56
      %p58 = scmp.ne.s32.totalorder %s50, %s53
      %p59 = scmp.eq.s32.totalorder %s17, 0
      %p60 = por %p58, %p59
      %p61 = scmp.ne.s32.totalorder %s50, %s53
      %p62 = scmp.eq.s32.totalorder %s22, 15
      %p63 = por %p61, %p62
      %p64 = scmp.ne.s32.totalorder %s53, %s54
      %p65 = scmp.eq.s32.totalorder %s22, 0
      %p66 = por %p64, %p65
      %p67 = scmp.ne.s32.totalorder %s53, %s54
      %p68 = scmp.eq.s32.totalorder %s23, 15
      %p69 = por %p67, %p68
      %p71 = scmp.ne.s32.totalorder %s54, %s70
      %p72 = scmp.eq.s32.totalorder %s23, 0
      %p73 = por %p71, %p72
      %s74 = ssub.s32 %s24, %s43
      %s75 = ssub.s32 %s25, %s39
      %s76 = sor.u32 %s74, %s75
      %p77 = scmp.eq.s32.totalorder %s76, 0
      %s79 = sadd.s32 %s78, 1
      %s80 = scalar_select %p77, %s78, %s79
      %p83 = pneg %p77
      %p84 = scmp.eq.s32.totalorder %s17, 15
      %p85 = por %p83, %p84
      %p86 = scmp.ne.s32.totalorder %s78, %s81
      %p87 = scmp.eq.s32.totalorder %s17, 0
      %p88 = por %p86, %p87
      %p89 = scmp.ne.s32.totalorder %s78, %s81
      %p90 = scmp.eq.s32.totalorder %s22, 15
      %p91 = por %p89, %p90
      %p92 = scmp.ne.s32.totalorder %s81, %s82
      %p93 = scmp.eq.s32.totalorder %s22, 0
      %p94 = por %p92, %p93
      %p95 = scmp.ne.s32.totalorder %s81, %s82
      %p96 = scmp.eq.s32.totalorder %s23, 15
      %p97 = por %p95, %p96
      %p99 = scmp.ne.s32.totalorder %s82, %s98
      %p100 = scmp.eq.s32.totalorder %s23, 0
      %p101 = por %p99, %p100
      %s102 = ssub.s32 %s24, %s43
      %p103 = scmp.eq.s32.totalorder %s102, 0
      %s105 = sadd.s32 %s104, 1
      %s106 = scalar_select %p103, %s104, %s105
      %p109 = pneg %p103
      %p110 = scmp.eq.s32.totalorder %s17, 15
      %p111 = por %p109, %p110
      %p112 = scmp.ne.s32.totalorder %s104, %s107
      %p113 = scmp.eq.s32.totalorder %s17, 0
      %p114 = por %p112, %p113
      %p115 = scmp.ne.s32.totalorder %s104, %s107
      %p116 = scmp.eq.s32.totalorder %s22, 15
      %p117 = por %p115, %p116
      %p118 = scmp.ne.s32.totalorder %s107, %s108
      %p119 = scmp.eq.s32.totalorder %s22, 0
      %p120 = por %p118, %p119
      %p121 = scmp.ne.s32.totalorder %s107, %s108
      %p122 = scmp.eq.s32.totalorder %s23, 15
      %p123 = por %p121, %p122
      %p125 = scmp.ne.s32.totalorder %s108, %s124
      %p126 = scmp.eq.s32.totalorder %s23, 0
      %p127 = por %p125, %p126
      %p128 = scmp.le.s32.totalorder 1, %s17
      %p129 = scmp.lt.s32.totalorder %s17, 17
      %p130 = pnand %p128, %p129
      %p131 = pneg %p130
      // Predicated region
      $region9: #{tpu_custom_call.1} parent=5 // pred_check
        _
      $region10: #{tpu_custom_call.1} parent=5 // pred_check_branch
        %133 = sbr.rel (%p130) target = $region12
      $region11: #{tpu_custom_call.1} parent=5 // pred_region
        %s134 = ssub.s32 %s17, 1
      $region12: #{tpu_custom_call.1} parent=5 // pred_fallthru
        _
      %p135 = scmp.lt.s32.totalorder %s17, 16
      // Predicated region
      $region13: #{tpu_custom_call.1} parent=5 // pred_check
        %p136 = pneg %p135
      $region14: #{tpu_custom_call.1} parent=5 // pred_check_branch
        %138 = sbr.rel (%p136) target = $region16
      $region15: #{tpu_custom_call.1} parent=5 // pred_region
        // Predicated region
        $region17: #{tpu_custom_call.1} parent=15 // pred_check
          %p139 = pneg %p60
        $region18: #{tpu_custom_call.1} parent=15 // pred_check_branch
          %141 = sbr.rel (%p139) target = $region20
        $region19: #{tpu_custom_call.1} parent=15 // pred_region
          %s142 = sand.u32 %s50, 1
          %s143 = scalar_lea.sflag [#allocation6], %s142
          %s144 = sand.u32 %s50, 1
          %s145 = smul.addr %s144, 24
          %s146 = scalar_lea.vmem [#allocation5], %s145
          %148 = vsyncadd %s143, 0
          %s149 = smul.addr %s26, 6
          %s150 = sadd.s32 %s25, %s149
          %s151 = smul.addr %s24, 24
          %s152 = sadd.s32 %s150, %s151
          %s153 = smul.addr %s152, 8
          %s154 = scalar_lea.hbm %s0, %s153
          %s155 = sshll.u32 %s154, 4
          %s156 = int_to_ptr.hbm [resolvable:$true] %s155
          %s157 = sshll.u32 %s146, 4
          %s158 = int_to_ptr.vmem [resolvable:$true] %s157
          %163 = dma.hbm_to_vmem [thread:$0]  %s156, 384, %s158, %s143, 256, 128, 8
        $region20: #{tpu_custom_call.1} parent=15 // pred_fallthru
          _
        // Predicated region
        $region21: #{tpu_custom_call.1} parent=15 // pred_check
          %p164 = pneg %p88
        $region22: #{tpu_custom_call.1} parent=15 // pred_check_branch
          %166 = sbr.rel (%p164) target = $region24
        $region23: #{tpu_custom_call.1} parent=15 // pred_region
          %s167 = sand.u32 %s78, 1
          %s168 = scalar_lea.sflag [#allocation9], %s167
          %s169 = sand.u32 %s78, 1
          %s170 = smul.addr %s169, 24
          %s171 = scalar_lea.vmem [#allocation8], %s170
          %173 = vsyncadd %s168, 0
          %s174 = smul.addr %s24, 6
          %s175 = sadd.s32 %s25, %s174
          %s176 = smul.addr %s175, 8
          %s177 = scalar_lea.hbm %s1, %s176
          %s178 = sshll.u32 %s177, 4
          %s179 = int_to_ptr.hbm [resolvable:$true] %s178
          %s180 = sshll.u32 %s171, 4
          %s181 = int_to_ptr.vmem [resolvable:$true] %s180
          %186 = dma.hbm_to_vmem [thread:$0]  %s179, 384, %s181, %s168, 256, 128, 8
        $region24: #{tpu_custom_call.1} parent=15 // pred_fallthru
          _
      $region16: #{tpu_custom_call.1} parent=5 // pred_fallthru
        _
      %p187 = scmp.le.s32.totalorder 1, %s17
      %p188 = scmp.lt.s32.totalorder %s17, 17
      %p189 = pnand %p187, %p188
      %p190 = pneg %p189
      // Predicated region
      $region25: #{tpu_custom_call.1} parent=5 // pred_check
        _
      $region26: #{tpu_custom_call.1} parent=5 // pred_check_branch
        %192 = sbr.rel (%p189) target = $region28
      $region27: #{tpu_custom_call.1} parent=5 // pred_region
        %s193 = ssub.s32 %s17, 1
        %s194 = sand.u32 %s53, 1
        %s195 = scalar_lea.sflag [#allocation6], %s194
        %s196 = sand.u32 %s53, 1
        %s197 = smul.addr %s196, 24
        %s198 = scalar_lea.vmem [#allocation5], %s197
        // Predicated region
        $region29: #{tpu_custom_call.1} parent=27 // pred_check
          %p199 = pneg %p66
        $region30: #{tpu_custom_call.1} parent=27 // pred_check_branch
          %201 = sbr.rel (%p199) target = $region32
        $region31: #{tpu_custom_call.1} parent=27 // pred_region
          %203 = dma.done %s195, 384
        $region32: #{tpu_custom_call.1} parent=27 // pred_fallthru
          _
        %s204 = sand.u32 %s81, 1
        %s205 = scalar_lea.sflag [#allocation9], %s204
        %s206 = sand.u32 %s81, 1
        %s207 = smul.addr %s206, 24
        %s208 = scalar_lea.vmem [#allocation8], %s207
        // Predicated region
        $region33: #{tpu_custom_call.1} parent=27 // pred_check
          %p209 = pneg %p94
        $region34: #{tpu_custom_call.1} parent=27 // pred_check_branch
          %211 = sbr.rel (%p209) target = $region36
        $region35: #{tpu_custom_call.1} parent=27 // pred_region
          %213 = dma.done %s205, 384
        $region36: #{tpu_custom_call.1} parent=27 // pred_fallthru
          _
        %s214 = sand.u32 %s53, 1
        %s215 = scalar_lea.sflag [#allocation6], %s214
        %s216 = sand.u32 %s53, 1
        %s217 = smul.addr %s216, 24
        %s218 = scalar_lea.vmem [#allocation5], %s217
        %p219 = pneg %p66
        %p220 = pneg %p63
        %s221 = sand.u32 %s81, 1
        %s222 = scalar_lea.sflag [#allocation9], %s221
        %s223 = sand.u32 %s81, 1
        %s224 = smul.addr %s223, 24
        %s225 = scalar_lea.vmem [#allocation8], %s224
        %p226 = pneg %p94
        %p227 = pneg %p91
        %p228 = pneg %p120
        %p229 = pneg %p117
        %s230 = sand.u32 %s107, 1
        %s231 = scalar_lea.sflag [#allocation7], %s230
        %s232 = sand.u32 %s107, 1
        %s233 = smul.addr %s232, 8
        %s234 = scalar_lea.vmem [#allocation10], %s233
        %p235 = scmp.eq.s32.totalorder %s28, 0
        %p236 = scmp.eq.s32.totalorder %s29, 0
        %p237 = pnand %p235, %p236
        %p238 = pneg %p237
        // Predicated region
        $region37: #{tpu_custom_call.1} parent=27 // pred_check
          _
        $region38: #{tpu_custom_call.1} parent=27 // pred_check_branch
          %240 = sbr.rel (%p237) target = $region40
        $region39: #{tpu_custom_call.1} parent=27 // pred_region
          %vm241 = vcmask 130048
          %242 = vst.msk [vmem:[%s234] sm:$0xff] %vm241, 0.0
          %vm243 = vcmask 122880
          %244 = vst.msk [vmem:[#allocation3] sm:$0x1] %vm243, 0.0
          %245 = vst.msk [vmem:[#allocation3 + $0x1] sm:$0x1] %vm243, 0.0
          %246 = vst.msk [vmem:[#allocation3 + $0x2] sm:$0x1] %vm243, 0.0
          %247 = vst.msk [vmem:[#allocation3 + $0x3] sm:$0x1] %vm243, 0.0
          %248 = vst.msk [vmem:[#allocation3 + $0x4] sm:$0x1] %vm243, 0.0
          %249 = vst.msk [vmem:[#allocation3 + $0x5] sm:$0x1] %vm243, 0.0
          %250 = vst.msk [vmem:[#allocation3 + $0x6] sm:$0x1] %vm243, 0.0
          %251 = vst.msk [vmem:[#allocation3 + $0x7] sm:$0x1] %vm243, 0.0
          %252 = vst.msk [vmem:[#allocation3 + $0x8] sm:$0x1] %vm243, 0.0
          %253 = vst.msk [vmem:[#allocation3 + $0x9] sm:$0x1] %vm243, 0.0
          %254 = vst.msk [vmem:[#allocation3 + $0xa] sm:$0x1] %vm243, 0.0
          %255 = vst.msk [vmem:[#allocation3 + $0xb] sm:$0x1] %vm243, 0.0
          %256 = vst.msk [vmem:[#allocation4] sm:$0x1] %vm243, 0.0
          %257 = vst.msk [vmem:[#allocation4 + $0x1] sm:$0x1] %vm243, 0.0
          %258 = vst.msk [vmem:[#allocation4 + $0x2] sm:$0x1] %vm243, 0.0
        $region40: #{tpu_custom_call.1} parent=27 // pred_fallthru
          _
        %v259 = vld [vmem:[%s198] sm:$0xff]
        %v260 = vld [vmem:[%s198 + $0x8] sm:$0xff]
        %v261 = vld [vmem:[%s198 + $0x10] sm:$0xff]
        %v262 = vld [vmem:[%s208] sm:$0xff]
        %v263 = vld [vmem:[%s208 + $0x8] sm:$0xff]
        %v264 = vld [vmem:[%s208 + $0x10] sm:$0xff]
        %v265 = vlaneseq
        %v266 = vand.u32 %v265, 127
        %vm267 = vcmp.eq.s32.totalorder %v266, 0
        %v268 = vlaneseq
        %v269 = vshrl.u32 %v268, 7
        %vm270 = vcmp.eq.s32.totalorder %v269, 0
        // Predicated region
        $region41: #{tpu_custom_call.1} parent=27 // pred_check
          %p271 = pneg %p236
        $region42: #{tpu_custom_call.1} parent=27 // pred_check_branch
          %273 = sbr.rel (%p271) target = $region44
        $region43: #{tpu_custom_call.1} parent=27 // pred_region
          %v274 = vld [vmem:[#allocation4] sm:$0x1]
          %v275 = vld [vmem:[#allocation4 + $0x1] sm:$0x1]
          %v276 = vld [vmem:[#allocation4 + $0x2] sm:$0x1]
          %vm277 = vcmask 1047680
          %278 = vrot.lane.b32.xlu0 %v262, 16
          %v279 = vpop.permute.xlu0 %278
          %v280 = vsel %vm277, %v279, %v262
          %281 = vrot.lane.b32.xlu0 %v263, 16
          %v282 = vpop.permute.xlu0 %281
          %v283 = vsel %vm277, %v282, %v263
          %284 = vrot.lane.b32.xlu0 %v264, 16
          %v285 = vpop.permute.xlu0 %284
          %v286 = vsel %vm277, %v285, %v264
          %287 = vrot.lane.b32.xlu0 %v280, 16
          %v288 = vpop.permute.xlu0 %287
          %289 = vrot.lane.b32.xlu0 %v283, 16
          %v290 = vpop.permute.xlu0 %289
          %291 = vrot.lane.b32.xlu0 %v286, 16
          %v292 = vpop.permute.xlu0 %291
          %v293 = vsel %vm277, %v288, %v262
          %v294 = vsel %vm277, %v290, %v263
          %v295 = vsel %vm277, %v292, %v264
          %v296 = vsel %vm267, 1, 0
          %vm297 = vcmp.eq.s32.totalorder %v296, 1
          %301 = vrot.lane.b32.xlu0 %v293, 113
          %v302 = vpop.permute.xlu0 %301
          %303 = vrot.lane.b32.xlu0 %v294, 113
          %v304 = vpop.permute.xlu0 %303
          %305 = vrot.lane.b32.xlu0 %v295, 113
          %v306 = vpop.permute.xlu0 %305
          %v310 = vsel %vm297, 0.0, %v302
          %v311 = vsel %vm297, 0.0, %v304
          %v312 = vsel %vm297, 0.0, %v306
          %v313 = vrot.slane %v262, 7
          %v314 = vrot.slane %v263, 7
          %v315 = vrot.slane %v264, 7
          %v316 = vsel %vm270, 1, 0
          %vm317 = vcmp.eq.s32.totalorder %v316, 1
          %v321 = vperm.slane %v274, 0
          %v322 = vperm.slane %v275, 0
          %v323 = vperm.slane %v276, 0
          %v327 = vsel %vm317, %v321, %v313
          %v328 = vsel %vm317, %v322, %v314
          %v329 = vsel %vm317, %v323, %v315
          %v330 = vsub.f32 %v310, %v262
          %v331 = vsub.f32 %v311, %v263
          %v332 = vsub.f32 %v312, %v264
          %v333 = vand.u32 2147483647, %v330
          %v334 = vand.u32 2147483647, %v331
          %v335 = vand.u32 2147483647, %v332
          %v336 = vsub.f32 %v327, %v262
          %v337 = vsub.f32 %v328, %v263
          %v338 = vsub.f32 %v329, %v264
          %v339 = vand.u32 2147483647, %v336
          %v340 = vand.u32 2147483647, %v337
          %v341 = vand.u32 2147483647, %v338
          %v342 = vadd.f32 %v333, %v339
          %v343 = vadd.f32 %v334, %v340
          %v344 = vadd.f32 %v335, %v341
          %vm345 = vcmask 130048
          %346 = vst.msk [vmem:[#allocation2] sm:$0xff] %vm345, %v342
          %347 = vst.msk [vmem:[#allocation2 + $0x8] sm:$0xff] %vm345, %v343
          %348 = vst.msk [vmem:[#allocation2 + $0x10] sm:$0xff] %vm345, %v344
          %vm349 = vcmask 130055
          %350 = vst.msk [vmem:[#allocation4 - $0x7] sm:$0x80] %vm349, %v262
          %351 = vst.msk [vmem:[#allocation4 - $0x6] sm:$0x80] %vm349, %v263
          %352 = vst.msk [vmem:[#allocation4 - $0x5] sm:$0x80] %vm349, %v264
        $region44: #{tpu_custom_call.1} parent=27 // pred_fallthru
          _
        %s353 = smul.u32 %s29, 3
        %s354 = scalar_lea.vmem [#allocation3], %s353
        %v355 = vld [vmem:[%s354] sm:$0x1]
        %v356 = vld [vmem:[%s354 + $0x1] sm:$0x1]
        %v357 = vld [vmem:[%s354 + $0x2] sm:$0x1]
        %vm358 = vcmask 1047680
        %359 = vrot.lane.b32.xlu0 %v259, 16
        %v360 = vpop.permute.xlu0 %359
        %v361 = vsel %vm358, %v360, %v259
        %362 = vrot.lane.b32.xlu0 %v260, 16
        %v363 = vpop.permute.xlu0 %362
        %v364 = vsel %vm358, %v363, %v260
        %365 = vrot.lane.b32.xlu0 %v261, 16
        %v366 = vpop.permute.xlu0 %365
        %v367 = vsel %vm358, %v366, %v261
        %368 = vrot.lane.b32.xlu0 %v361, 16
        %v369 = vpop.permute.xlu0 %368
        %370 = vrot.lane.b32.xlu0 %v364, 16
        %v371 = vpop.permute.xlu0 %370
        %372 = vrot.lane.b32.xlu0 %v367, 16
        %v373 = vpop.permute.xlu0 %372
        %v374 = vsel %vm358, %v369, %v259
        %v375 = vsel %vm358, %v371, %v260
        %v376 = vsel %vm358, %v373, %v261
        %v377 = vsel %vm267, 1, 0
        %vm378 = vcmp.eq.s32.totalorder %v377, 1
        %382 = vrot.lane.b32.xlu0 %v374, 113
        %v383 = vpop.permute.xlu0 %382
        %384 = vrot.lane.b32.xlu0 %v375, 113
        %v385 = vpop.permute.xlu0 %384
        %386 = vrot.lane.b32.xlu0 %v376, 113
        %v387 = vpop.permute.xlu0 %386
        %v391 = vsel %vm378, 0.0, %v383
        %v392 = vsel %vm378, 0.0, %v385
        %v393 = vsel %vm378, 0.0, %v387
        %v394 = vrot.slane %v259, 7
        %v395 = vrot.slane %v260, 7
        %v396 = vrot.slane %v261, 7
        %v397 = vsel %vm270, 1, 0
        %vm398 = vcmp.eq.s32.totalorder %v397, 1
        %v402 = vperm.slane %v355, 0
        %v403 = vperm.slane %v356, 0
        %v404 = vperm.slane %v357, 0
        %v408 = vsel %vm398, %v402, %v394
        %v409 = vsel %vm398, %v403, %v395
        %v410 = vsel %vm398, %v404, %v396
        %v411 = vsub.f32 %v391, %v259
        %v412 = vsub.f32 %v392, %v260
        %v413 = vsub.f32 %v393, %v261
        %v414 = vand.u32 2147483647, %v411
        %v415 = vand.u32 2147483647, %v412
        %v416 = vand.u32 2147483647, %v413
        %v417 = vsub.f32 %v408, %v259
        %v418 = vsub.f32 %v409, %v260
        %v419 = vsub.f32 %v410, %v261
        %v420 = vand.u32 2147483647, %v417
        %v421 = vand.u32 2147483647, %v418
        %v422 = vand.u32 2147483647, %v419
        %v423 = vadd.f32 %v414, %v420
        %v424 = vadd.f32 %v415, %v421
        %v425 = vadd.f32 %v416, %v422
        %vm426 = vcmask 130055
        %427 = vst.msk [vmem:[%s354 - $0x7] sm:$0x80] %vm426, %v259
        %428 = vst.msk [vmem:[%s354 - $0x6] sm:$0x80] %vm426, %v260
        %429 = vst.msk [vmem:[%s354 - $0x5] sm:$0x80] %vm426, %v261
        %v430 = vsub.f32 %v259, %v262
        %v431 = vsub.f32 %v260, %v263
        %v432 = vsub.f32 %v261, %v264
        %v433 = vmul.f32 %v430, %v430
        %v434 = vmul.f32 %v431, %v431
        %v435 = vmul.f32 %v432, %v432
        %v436 = vld [vmem:[#allocation2] sm:$0xff]
        %v437 = vld [vmem:[#allocation2 + $0x8] sm:$0xff]
        %v438 = vld [vmem:[#allocation2 + $0x10] sm:$0xff]
        %v439 = vsub.f32 %v423, %v436
        %v440 = vsub.f32 %v424, %v437
        %v441 = vsub.f32 %v425, %v438
        %v442 = vand.u32 2147483647, %v439
        %v443 = vand.u32 2147483647, %v440
        %v444 = vand.u32 2147483647, %v441
        %v445 = vadd.f32 %v433, %v442
        %v446 = vadd.f32 %v434, %v443
        %v447 = vadd.f32 %v435, %v444
        %v448 = vld [vmem:[%s234] sm:$0xff]
        %vm449 = vcmask 130048
        %v450 = vsel %vm449, %v445, 0.0
        %v451 = vsel %vm449, %v446, 0.0
        %v452 = vadd.f32 %v450, %v451
        %v453 = vsel %vm449, %v447, 0.0
        %v454 = vadd.f32 %v452, %v453
        %v455 = vadd.f32 %v448, %v454
        %456 = vst.msk [vmem:[%s234] sm:$0xff] %vm449, %v455
        %s457 = sand.u32 %s107, 1
        %s458 = scalar_lea.sflag [#allocation7], %s457
        %s459 = sand.u32 %s107, 1
        %s460 = smul.addr %s459, 8
        %s461 = scalar_lea.vmem [#allocation10], %s460
        // Predicated region
        $region45: #{tpu_custom_call.1} parent=27 // pred_check
          %p462 = pneg %p117
        $region46: #{tpu_custom_call.1} parent=27 // pred_check_branch
          %464 = sbr.rel (%p462) target = $region48
        $region47: #{tpu_custom_call.1} parent=27 // pred_region
          %466 = vsyncadd %s458, 0
          %s467 = smul.addr %s27, 8
          %s468 = scalar_lea.hbm %s2, %s467
          %s470 = sshll.u32 %s461, 4
          %s471 = int_to_ptr.vmem [resolvable:$true] %s470
          %s472 = sshll.u32 %s468, 4
          %s473 = int_to_ptr.hbm [resolvable:$true] %s472
          %475 = dma.vmem_to_hbm [thread:$0]  %s471, 128, %s473, %s458
        $region48: #{tpu_custom_call.1} parent=27 // pred_fallthru
          _
      $region28: #{tpu_custom_call.1} parent=5 // pred_fallthru
        _
      %p476 = scmp.le.s32.totalorder 2, %s17
      // Predicated region
      $region49: #{tpu_custom_call.1} parent=5 // pred_check
        %p477 = pneg %p476
      $region50: #{tpu_custom_call.1} parent=5 // pred_check_branch
        %479 = sbr.rel (%p477) target = $region52
      $region51: #{tpu_custom_call.1} parent=5 // pred_region
        %s480 = ssub.s32 %s17, 2
        // Predicated region
        $region53: #{tpu_custom_call.1} parent=51 // pred_check
          %p481 = pneg %p123
        $region54: #{tpu_custom_call.1} parent=51 // pred_check_branch
          %483 = sbr.rel (%p481) target = $region56
        $region55: #{tpu_custom_call.1} parent=51 // pred_region
          %s484 = sand.u32 %s108, 1
          %s485 = scalar_lea.sflag [#allocation7], %s484
          %s486 = sand.u32 %s108, 1
          %s487 = smul.addr %s486, 8
          %s488 = scalar_lea.vmem [#allocation10], %s487
          %490 = dma.done %s485, 128
        $region56: #{tpu_custom_call.1} parent=51 // pred_fallthru
          _
      $region52: #{tpu_custom_call.1} parent=5 // pred_fallthru
        _
    $region6: #{tpu_custom_call.1} parent=1 // loop_footer
      %s21 = sadd.s32 1, %s17
    $region7: #{tpu_custom_call.1} parent=1 // loop_footer_branch
      %16 = sbr.rel target = $region3
    $region8: #{tpu_custom_call.1} parent=1 // loop_exit
      _
    %491 = vsyncpa [#allocation6], 1
    %s492 = scalar_lea.sflag [#allocation6], 1
    %493 = vsyncpa %s492, 1
    %494 = vsyncpa [#allocation9], 1
    %s495 = scalar_lea.sflag [#allocation9], 1
    %496 = vsyncpa %s495, 1
    %497 = vsyncpa [#allocation7], 1
    %s498 = scalar_lea.sflag [#allocation7], 1
    %499 = vsyncpa %s498, 1

</llo_original>
